<compile_context>
chip_gen: v7x
topology: tpu7x:2x2x1
jax: 0.10.0
libtpu: 0.0.40
codegen_flags: <defaults>
</compile_context>

<pallas_src>
import jax
import jax.numpy as jnp
import numpy as np
from jax.experimental import pallas as pl
from jax.experimental.pallas import tpu as pltpu


def _conv_gemm_kernel(p_ref, w_ref, b_ref, o_ref):
    """Single fused im2col GEMM for the whole batch.

    p_ref: (K_pad, NM_pad)   im2col patches for all images (bf16)
    w_ref: (Cout, K_pad)     conv weights reshaped from OIHW (bf16, K zero-padded)
    b_ref: (Cout, 1)         bias, f32 (broadcast along lanes)
    o_ref: (Cout, NM_pad)    output slab, f32, lane-dense (multiple of 128)
    """
    acc = jnp.dot(w_ref[...], p_ref[...],
                  preferred_element_type=jnp.float32)        # (Cout, NM_pad) f32
    o_ref[...] = (acc + b_ref[...]).astype(o_ref.dtype)


def conv2d_pallas(x_nchw, w_oihw, bias, *, compute_dtype=jnp.bfloat16):
    """nn.Conv2d(3, 64, kernel_size=3) forward (stride 1, no padding, bias)."""
    N, Cin, H, W = x_nchw.shape
    Cout, _, KH, KW = w_oihw.shape
    OH, OW = H - KH + 1, W - KW + 1
    K = Cin * KH * KW            # 27
    M = OH * OW                  # 196
    NM = N * M                   # 392

    # Pad to TPU-friendly sizes: sublane (K) -> multiple of 8, lane (N*M) -> 128.
    K_pad = ((K + 7) // 8) * 8           # 32
    NM_pad = ((NM + 127) // 128) * 128   # 512

    # im2col in the wrapper (pure layout plumbing, zero arithmetic):
    # patches[k, n*M + (oh*OW + ow)] = x[n, ci, oh+kh, ow+kw],
    #   k = ci*KH*KW + kh*KW + kw   (matches OIHW weight flatten order)
    taps = [x_nchw[:, :, kh:kh + OH, kw:kw + OW]
            for kh in range(KH) for kw in range(KW)]          # each (N, Cin, OH, OW)
    patches = jnp.stack(taps, axis=2).reshape(N, K, M)        # (N, K, M)
    patches = patches.transpose(1, 0, 2).reshape(K, NM)       # (K, N*M)
    patches = jnp.pad(patches, ((0, K_pad - K), (0, NM_pad - NM)))
    patches = patches.astype(compute_dtype)                   # (K_pad, NM_pad)

    w_mat = jnp.pad(w_oihw.reshape(Cout, K),
                    ((0, 0), (0, K_pad - K))).astype(compute_dtype)   # (Cout, K_pad)
    b_mat = bias.reshape(Cout, 1).astype(jnp.float32)                 # (Cout, 1)

    out_dtype = x_nchw.dtype
    itemsize_in = jnp.dtype(compute_dtype).itemsize
    cost = pl.CostEstimate(
        flops=2 * Cout * K_pad * NM_pad,
        transcendentals=0,
        bytes_accessed=(K_pad * NM_pad * itemsize_in          # patches
                        + Cout * K_pad * itemsize_in          # weights
                        + Cout * 4                            # bias
                        + Cout * NM_pad * 4),                 # output
    )

    out = pl.pallas_call(
        _conv_gemm_kernel,
        out_shape=jax.ShapeDtypeStruct((Cout, NM_pad), out_dtype),
        grid=(1,),
        in_specs=[
            pl.BlockSpec((K_pad, NM_pad), lambda i: (0, 0)),
            pl.BlockSpec((Cout, K_pad), lambda i: (0, 0)),
            pl.BlockSpec((Cout, 1), lambda i: (0, 0)),
        ],
        out_specs=pl.BlockSpec((Cout, NM_pad), lambda i: (0, 0)),
        compiler_params=pltpu.CompilerParams(
            dimension_semantics=("arbitrary",)),
        cost_estimate=cost,
    )(patches, w_mat, b_mat)

    # Drop lane padding, then (Cout, N*M) -> (N, Cout, OH, OW).
    out = out[:, :NM].reshape(Cout, N, OH, OW).transpose(1, 0, 2, 3)
    return out


if __name__ == "__main__":
    key = jax.random.PRNGKey(0)
    k_x, k_w, k_b = jax.random.split(key, 3)

    # Small shapes consistent with Conv2d(3, 64, kernel_size=3).
    N, Cin, H, W = 2, 3, 16, 16
    Cout, KH, KW = 64, 3, 3

    x = jax.random.normal(k_x, (N, Cin, H, W), dtype=jnp.float32)

    # Deterministic parameter init (mimics PyTorch's uniform(-1/sqrt(fan_in), ...)).
    fan_in = Cin * KH * KW
    bound = 1.0 / float(np.sqrt(fan_in))
    w = jax.random.uniform(k_w, (Cout, Cin, KH, KW), jnp.float32, -bound, bound)
    b = jax.random.uniform(k_b, (Cout,), jnp.float32, -bound, bound)

    out = conv2d_pallas(x, w, b)
    out = jax.block_until_ready(out)
    assert out.shape == (N, Cout, H - KH + 1, W - KW + 1)
    assert out.dtype == jnp.float32

    # Pure-JAX reference with the same bf16 operand rounding (f32 accumulation).
    ref_bf16 = jax.lax.conv_general_dilated(
        x.astype(jnp.bfloat16), w.astype(jnp.bfloat16),
        window_strides=(1, 1), padding="VALID",
        dimension_numbers=("NCHW", "OIHW", "NCHW"),
        preferred_element_type=jnp.float32) + b[None, :, None, None]
    np.testing.assert_allclose(np.asarray(out), np.asarray(ref_bf16),
                               atol=2e-3, rtol=2e-3)

    # Looser sanity check against the full-f32 conv (bf16 operand rounding only).
    ref_f32 = jax.lax.conv_general_dilated(
        x, w, window_strides=(1, 1), padding="VALID",
        dimension_numbers=("NCHW", "OIHW", "NCHW")) + b[None, :, None, None]
    np.testing.assert_allclose(np.asarray(out), np.asarray(ref_f32),
                               atol=5e-2, rtol=5e-2)

    print("KERNEL_OK")
</pallas_src>

<mosaic_0001>
module attributes {stable_mosaic.version = 11 : i64} {
  func.func @_conv_gemm_kernel(%arg0: i32, %arg1: memref<32x512xbf16, #tpu.memory_space<vmem>>, %arg2: memref<64x32xbf16, #tpu.memory_space<vmem>>, %arg3: memref<64x1xf32, #tpu.memory_space<vmem>>, %arg4: memref<64x512xf32, #tpu.memory_space<vmem>>) attributes {dimension_semantics = [#tpu.dimension_semantics<arbitrary>], iteration_bounds = array<i64: 1>, scalar_prefetch = 0 : i64, scratch_operands = 0 : i64, tpu.core_type = #tpu.core_type<tc>, window_params = [{pipeline_mode = #tpu.pipeline_mode<synchronous>, transform_indices = @transform_0, window_bounds = array<i64: 32, 512>}, {pipeline_mode = #tpu.pipeline_mode<synchronous>, transform_indices = @transform_1, window_bounds = array<i64: 64, 32>}, {pipeline_mode = #tpu.pipeline_mode<synchronous>, transform_indices = @transform_2, window_bounds = array<i64: 64, 1>}, {pipeline_mode = #tpu.pipeline_mode<synchronous>, transform_indices = @transform_3, window_bounds = array<i64: 64, 512>}]} {
    %c0 = arith.constant 0 : index
    %c0_0 = arith.constant 0 : index
    %0 = vector.load %arg2[%c0, %c0_0] : memref<64x32xbf16, #tpu.memory_space<vmem>>, vector<64x32xbf16>
    %c0_1 = arith.constant 0 : index
    %c0_2 = arith.constant 0 : index
    %1 = vector.load %arg1[%c0_1, %c0_2] : memref<32x512xbf16, #tpu.memory_space<vmem>>, vector<32x512xbf16>
    %cst = arith.constant dense<0.000000e+00> : vector<64x512xf32>
    %2 = tpu.matmul %0, %1, %cst {dimension_numbers = #tpu.dot_dimension_numbers<[1], [0], [0], [1], [0, 0, 1, 1], [], []>} : vector<64x32xbf16>, vector<32x512xbf16>, vector<64x512xf32> -> vector<64x512xf32>
    %c0_3 = arith.constant 0 : index
    %c0_4 = arith.constant 0 : index
    %3 = vector.load %arg3[%c0_3, %c0_4] : memref<64x1xf32, #tpu.memory_space<vmem>>, vector<64x1xf32>
    %4 = vector.broadcast %3 : vector<64x1xf32> to vector<64x512xf32>
    %5 = arith.addf %2, %4 : vector<64x512xf32>
    %c0_5 = arith.constant 0 : index
    %c0_6 = arith.constant 0 : index
    %6 = vector.load %arg4[%c0_5, %c0_6] : memref<64x512xf32, #tpu.memory_space<vmem>>, vector<64x512xf32>
    tpu.vector_store %arg4[%c0_5, %c0_6], %5 {strides = array<i32>} : memref<64x512xf32, #tpu.memory_space<vmem>>, vector<64x512xf32>,
    return
  }
  func.func @transform_0(%arg0: i32) -> (i32, i32) {
    %c0_i32 = arith.constant 0 : i32
    %c0_i32_0 = arith.constant 0 : i32
    %c0_i32_1 = arith.constant 0 : i32
    return %c0_i32, %c0_i32_0 : i32, i32
  }
  func.func @transform_1(%arg0: i32) -> (i32, i32) {
    %c0_i32 = arith.constant 0 : i32
    %c0_i32_0 = arith.constant 0 : i32
    %c0_i32_1 = arith.constant 0 : i32
    return %c0_i32, %c0_i32_0 : i32, i32
  }
  func.func @transform_2(%arg0: i32) -> (i32, i32) {
    %c0_i32 = arith.constant 0 : i32
    %c0_i32_0 = arith.constant 0 : i32
    %c0_i32_1 = arith.constant 0 : i32
    return %c0_i32, %c0_i32_0 : i32, i32
  }
  func.func @transform_3(%arg0: i32) -> (i32, i32) {
    %c0_i32 = arith.constant 0 : i32
    %c0_i32_0 = arith.constant 0 : i32
    %c0_i32_1 = arith.constant 0 : i32
    return %c0_i32, %c0_i32_0 : i32, i32
  }
}

</mosaic_0001>

<llo_original>
// kernel: tpu_custom_call.1
$region0: #{tpu_custom_call.1}
  #allocation0 [shape = 'u32[]', space=smem, size = 0x4, offset = 0x4, fixed_abs, tag = 'smem constant byte address 0x4 - core index']
  #allocation1 [shape = 'u32[144,128]{1,0:T(1,128)}', space=vmem, size = 0x12000, scoped, tag = 'internal scratch']
  %s0 = inlined_call_operand.vmem [shape: bf16[32,512], index: 0, kind: input, shape index: {}]
  %s1 = inlined_call_operand.vmem [shape: bf16[64,32], index: 1, kind: input, shape index: {}]
  %s2 = inlined_call_operand.vmem [shape: f32[64,1], index: 2, kind: input, shape index: {}]
  %s3 = inlined_call_operand.hbm [shape: f32[64,512], index: 3, kind: output, shape index: {}]
  %s4 = sld [smem:[#allocation0]]
  $region22: #{tpu_custom_call.1} parent=0
    _
  %s6 = ssub.s32 1, %s4
  %s7 = scalar_select 0, %s6, %s4
  $region1: #{tpu_custom_call.1} parent=0
    #allocation2 [shape = 'u8[131072]{0}', space=vmem, size = 0x20000, scoped, tag = 'output window, operand 0, single buffered']
    #allocation3 [shape = 's32[1]{0}', space=sflag, size = 0x4, scoped, tag = 'scoped memory for tpu_custom_call.1']
    %8 = vsyncpa [#allocation3], 0
    // Predicated region
    $region2: #{tpu_custom_call.1} parent=1 // pred_check
      _
    $region3: #{tpu_custom_call.1} parent=1 // pred_check_branch
      %10 = sbr.rel (0) target = $region5
    $region4: #{tpu_custom_call.1} parent=1 // pred_region
      _
    $region5: #{tpu_custom_call.1} parent=1 // pred_fallthru
      _
    // Predicated region
    $region6: #{tpu_custom_call.1} parent=1 // pred_check
      _
    $region7: #{tpu_custom_call.1} parent=1 // pred_check_branch
      %12 = sbr.rel (0) target = $region9
    $region8: #{tpu_custom_call.1} parent=1 // pred_region
      _
    $region9: #{tpu_custom_call.1} parent=1 // pred_fallthru
      _
    // Predicated region
    $region10: #{tpu_custom_call.1} parent=1 // pred_check
      _
    $region11: #{tpu_custom_call.1} parent=1 // pred_check_branch
      %14 = sbr.rel (0) target = $region13
    $region12: #{tpu_custom_call.1} parent=1 // pred_region
      _
    $region13: #{tpu_custom_call.1} parent=1 // pred_fallthru
      _
    %v16 = vld [vmem:[%s1] sm:$0xf]
    %v17 = vld [vmem:[%s1 + $0x4] sm:$0xf]
    %v18 = vld [vmem:[%s1 + $0x8] sm:$0xf]
    %v19 = vld [vmem:[%s1 + $0xc] sm:$0xf]
    %v20 = vld [vmem:[%s1 + $0x10] sm:$0xf]
    %v21 = vld [vmem:[%s1 + $0x14] sm:$0xf]
    %v22 = vld [vmem:[%s1 + $0x18] sm:$0xf]
    %v23 = vld [vmem:[%s1 + $0x1c] sm:$0xf]
    %v24 = vld [vmem:[%s0] sm:$0xff]
    %v25 = vld [vmem:[%s0 + $0x8] sm:$0xff]
    %v26 = vld [vmem:[%s0 + $0x10] sm:$0xff]
    %v27 = vld [vmem:[%s0 + $0x18] sm:$0xff]
    %v28 = vld [vmem:[%s0 + $0x20] sm:$0xff]
    %v29 = vld [vmem:[%s0 + $0x28] sm:$0xff]
    %v30 = vld [vmem:[%s0 + $0x30] sm:$0xff]
    %v31 = vld [vmem:[%s0 + $0x38] sm:$0xff]
    %v32 = vld [vmem:[%s2] sm:$0xff]
    %v33 = vld [vmem:[%s2 + $0x8] sm:$0xff]
    %v34 = vld [vmem:[%s2 + $0x10] sm:$0xff]
    %v35 = vld [vmem:[%s2 + $0x18] sm:$0xff]
    %v36 = vld [vmem:[%s2 + $0x20] sm:$0xff]
    %v37 = vld [vmem:[%s2 + $0x28] sm:$0xff]
    %v38 = vld [vmem:[%s2 + $0x30] sm:$0xff]
    %v39 = vld [vmem:[%s2 + $0x38] sm:$0xff]
    %41 = vset.pattern.permute.xlu0 0
    %42 = vperm.xlu0 %41, %v32
    %v43 = vpop.permute.xlu0 %42
    %46 = vset.pattern.permute.xlu0 0
    %47 = vperm.xlu0 %46, %v33
    %v48 = vpop.permute.xlu0 %47
    %51 = vset.pattern.permute.xlu0 0
    %52 = vperm.xlu0 %51, %v34
    %v53 = vpop.permute.xlu0 %52
    %56 = vset.pattern.permute.xlu0 0
    %57 = vperm.xlu0 %56, %v35
    %v58 = vpop.permute.xlu0 %57
    %61 = vset.pattern.permute.xlu0 0
    %62 = vperm.xlu0 %61, %v36
    %v63 = vpop.permute.xlu0 %62
    %66 = vset.pattern.permute.xlu0 0
    %67 = vperm.xlu0 %66, %v37
    %v68 = vpop.permute.xlu0 %67
    %71 = vset.pattern.permute.xlu0 0
    %72 = vperm.xlu0 %71, %v38
    %v73 = vpop.permute.xlu0 %72
    %76 = vset.pattern.permute.xlu0 0
    %77 = vperm.xlu0 %76, %v39
    %v78 = vpop.permute.xlu0 %77
    %v88 = vunpack.c.l.b16 %v16
    %v89 = vunpack.c.l.b16 %v17
    %v90 = vunpack.c.l.b16 %v18
    %v91 = vunpack.c.l.b16 %v19
    %v92 = vunpack.c.l.b16 %v20
    %v93 = vunpack.c.l.b16 %v21
    %v94 = vunpack.c.l.b16 %v22
    %v95 = vunpack.c.l.b16 %v23
    %v96 = vpack.c.b16 %v89, %v88
    %v97 = vpack.c.b16 %v91, %v90
    %v98 = vpack.c.b16 %v93, %v92
    %v99 = vpack.c.b16 %v95, %v94
    %v108 = vunpack.c.l.b16 %v24
    %v109 = vunpack.c.h.b16 %v24
    %v110 = vunpack.c.l.b16 %v25
    %v111 = vunpack.c.h.b16 %v25
    %v112 = vunpack.c.l.b16 %v26
    %v113 = vunpack.c.h.b16 %v26
    %v114 = vunpack.c.l.b16 %v27
    %v115 = vunpack.c.h.b16 %v27
    %v116 = vunpack.c.l.b16 %v28
    %v117 = vunpack.c.h.b16 %v28
    %v118 = vunpack.c.l.b16 %v29
    %v119 = vunpack.c.h.b16 %v29
    %v120 = vunpack.c.l.b16 %v30
    %v121 = vunpack.c.h.b16 %v30
    %v122 = vunpack.c.l.b16 %v31
    %v123 = vunpack.c.h.b16 %v31
    %v124 = vpack.c.b16 %v112, %v108
    %v125 = vpack.c.b16 %v113, %v109
    %v126 = vpack.c.b16 %v114, %v110
    %v127 = vpack.c.b16 %v115, %v111
    %v128 = vpack.c.b16 %v120, %v116
    %v129 = vpack.c.b16 %v121, %v117
    %v130 = vpack.c.b16 %v122, %v118
    %v131 = vpack.c.b16 %v123, %v119
    %vm140 = vcmask 261120
    %v142 = vsel %vm140, %v96, 0
    %v145 = vsel %vm140, %v97, 0
    %v148 = vsel %vm140, %v98, 0
    %v151 = vsel %vm140, %v99, 0
    %153 = vmatprep.subr.bf16.mxu0 %v125
    %154 = vmatpush1.bf16.msra.mxu0 %v124
    %155 = vmatprep.subr.bf16.mxu0 %v129
    %156 = vmatpush1.bf16.msra.mxu0 %v128
    %157 = vmatprep.subr.bf16.mxu0 0
    %158 = vmatpush1.bf16.msra.mxu0 0
    %159 = vmatprep.subr.bf16.mxu0 0
    %160 = vmatpush1.bf16.msra.mxu0 0
    %161 = vmatprep.subr.bf16.mxu0 0
    %162 = vmatpush1.bf16.msra.mxu0 0
    %163 = vmatprep.subr.bf16.mxu0 0
    %164 = vmatpush1.bf16.msra.mxu0 0
    %165 = vmatprep.subr.bf16.mxu0 0
    %166 = vmatpush1.bf16.msra.mxu0 0
    %167 = vmatprep.subr.bf16.mxu0 0
    %168 = vmatpush1.bf16.msra.mxu0 0
    %169 = vmatprep.subr.bf16.mxu0 0
    %170 = vmatpush1.bf16.msra.mxu0 0
    %171 = vmatprep.subr.bf16.mxu0 0
    %172 = vmatpush1.bf16.msra.mxu0 0
    %173 = vmatprep.subr.bf16.mxu0 0
    %174 = vmatpush1.bf16.msra.mxu0 0
    %175 = vmatprep.subr.bf16.mxu0 0
    %176 = vmatpush1.bf16.msra.mxu0 0
    %177 = vmatprep.subr.bf16.mxu0 0
    %178 = vmatpush1.bf16.msra.mxu0 0
    %179 = vmatprep.subr.bf16.mxu0 0
    %180 = vmatpush1.bf16.msra.mxu0 0
    %181 = vmatprep.subr.bf16.mxu0 0
    %182 = vmatpush1.bf16.msra.mxu0 0
    %183 = vmatprep.subr.bf16.mxu0 0
    %184 = vmatpush1.bf16.msra.mxu0 0
    %185 = vmatprep.mubr.bf16.mxu0 0
    %186 = vmatmul.mubr.bf16.gmra.mrb[0].mxu0 %v142
    %v187 = vpop.f32.mrb[0].mxu0
    %v188 = vadd.f32 %v43, %v187
    %v189 = vpop.f32.mrb[0].mxu0
    %v190 = vadd.f32 %v43, %v189
    %v191 = vpop.f32.mrb[0].mxu0
    %v192 = vadd.f32 %v48, %v191
    %v193 = vpop.f32.mrb[0].mxu0
    %v194 = vadd.f32 %v48, %v193
    %195 = vmatprep.mubr.bf16.mxu0 0
    %196 = vmatmul.mubr.bf16.gmra.mrb[0].mxu0 %v145
    %v197 = vpop.f32.mrb[0].mxu0
    %v198 = vadd.f32 %v53, %v197
    %v199 = vpop.f32.mrb[0].mxu0
    %v200 = vadd.f32 %v53, %v199
    %v201 = vpop.f32.mrb[0].mxu0
    %v202 = vadd.f32 %v58, %v201
    %v203 = vpop.f32.mrb[0].mxu0
    %v204 = vadd.f32 %v58, %v203
    %205 = vmatprep.mubr.bf16.mxu0 0
    %206 = vmatmul.mubr.bf16.gmra.mrb[0].mxu0 %v148
    %v207 = vpop.f32.mrb[0].mxu0
    %v208 = vadd.f32 %v63, %v207
    %v209 = vpop.f32.mrb[0].mxu0
    %v210 = vadd.f32 %v63, %v209
    %v211 = vpop.f32.mrb[0].mxu0
    %v212 = vadd.f32 %v68, %v211
    %v213 = vpop.f32.mrb[0].mxu0
    %v214 = vadd.f32 %v68, %v213
    %215 = vmatprep.mubr.bf16.mxu0 0
    %216 = vmatmul.mubr.bf16.gmra.mrb[0].mxu0 %v151
    %v217 = vpop.f32.mrb[0].mxu0
    %v218 = vadd.f32 %v73, %v217
    %v219 = vpop.f32.mrb[0].mxu0
    %v220 = vadd.f32 %v73, %v219
    %v221 = vpop.f32.mrb[0].mxu0
    %v222 = vadd.f32 %v78, %v221
    %v223 = vpop.f32.mrb[0].mxu0
    %v224 = vadd.f32 %v78, %v223
    %225 = vdwg.mxu0
    %226 = vmatprep.subr.bf16.mxu0 %v127
    %227 = vmatpush1.bf16.msra.mxu0 %v126
    %228 = vmatprep.subr.bf16.mxu0 %v131
    %229 = vmatpush1.bf16.msra.mxu0 %v130
    %230 = vmatprep.subr.bf16.mxu0 0
    %231 = vmatpush1.bf16.msra.mxu0 0
    %232 = vmatprep.subr.bf16.mxu0 0
    %233 = vmatpush1.bf16.msra.mxu0 0
    %234 = vmatprep.subr.bf16.mxu0 0
    %235 = vmatpush1.bf16.msra.mxu0 0
    %236 = vmatprep.subr.bf16.mxu0 0
    %237 = vmatpush1.bf16.msra.mxu0 0
    %238 = vmatprep.subr.bf16.mxu0 0
    %239 = vmatpush1.bf16.msra.mxu0 0
    %240 = vmatprep.subr.bf16.mxu0 0
    %241 = vmatpush1.bf16.msra.mxu0 0
    %242 = vmatprep.subr.bf16.mxu0 0
    %243 = vmatpush1.bf16.msra.mxu0 0
    %244 = vmatprep.subr.bf16.mxu0 0
    %245 = vmatpush1.bf16.msra.mxu0 0
    %246 = vmatprep.subr.bf16.mxu0 0
    %247 = vmatpush1.bf16.msra.mxu0 0
    %248 = vmatprep.subr.bf16.mxu0 0
    %249 = vmatpush1.bf16.msra.mxu0 0
    %250 = vmatprep.subr.bf16.mxu0 0
    %251 = vmatpush1.bf16.msra.mxu0 0
    %252 = vmatprep.subr.bf16.mxu0 0
    %253 = vmatpush1.bf16.msra.mxu0 0
    %254 = vmatprep.subr.bf16.mxu0 0
    %255 = vmatpush1.bf16.msra.mxu0 0
    %256 = vmatprep.subr.bf16.mxu0 0
    %257 = vmatpush1.bf16.msra.mxu0 0
    %258 = vmatprep.mubr.bf16.mxu0 0
    %259 = vmatmul.mubr.bf16.gmra.mrb[0].mxu0 %v142
    %v260 = vpop.f32.mrb[0].mxu0
    %v261 = vadd.f32 %v43, %v260
    %v262 = vpop.f32.mrb[0].mxu0
    %v263 = vadd.f32 %v43, %v262
    %v264 = vpop.f32.mrb[0].mxu0
    %v265 = vadd.f32 %v48, %v264
    %v266 = vpop.f32.mrb[0].mxu0
    %v267 = vadd.f32 %v48, %v266
    %268 = vmatprep.mubr.bf16.mxu0 0
    %269 = vmatmul.mubr.bf16.gmra.mrb[0].mxu0 %v145
    %v270 = vpop.f32.mrb[0].mxu0
    %v271 = vadd.f32 %v53, %v270
    %v272 = vpop.f32.mrb[0].mxu0
    %v273 = vadd.f32 %v53, %v272
    %v274 = vpop.f32.mrb[0].mxu0
    %v275 = vadd.f32 %v58, %v274
    %v276 = vpop.f32.mrb[0].mxu0
    %v277 = vadd.f32 %v58, %v276
    %278 = vmatprep.mubr.bf16.mxu0 0
    %279 = vmatmul.mubr.bf16.gmra.mrb[0].mxu0 %v148
    %v280 = vpop.f32.mrb[0].mxu0
    %v281 = vadd.f32 %v63, %v280
    %v282 = vpop.f32.mrb[0].mxu0
    %v283 = vadd.f32 %v63, %v282
    %v284 = vpop.f32.mrb[0].mxu0
    %v285 = vadd.f32 %v68, %v284
    %v286 = vpop.f32.mrb[0].mxu0
    %v287 = vadd.f32 %v68, %v286
    %288 = vmatprep.mubr.bf16.mxu0 0
    %289 = vmatmul.mubr.bf16.gmra.mrb[0].mxu0 %v151
    %v290 = vpop.f32.mrb[0].mxu0
    %v291 = vadd.f32 %v73, %v290
    %v292 = vpop.f32.mrb[0].mxu0
    %v293 = vadd.f32 %v73, %v292
    %v294 = vpop.f32.mrb[0].mxu0
    %v295 = vadd.f32 %v78, %v294
    %v296 = vpop.f32.mrb[0].mxu0
    %v297 = vadd.f32 %v78, %v296
    %298 = vdwg.mxu0
    %299 = vst [vmem:[#allocation2] sm:$0xff] %v188
    %300 = vst [vmem:[#allocation2 + $0x8] sm:$0xff] %v190
    %301 = vst [vmem:[#allocation2 + $0x10] sm:$0xff] %v261
    %302 = vst [vmem:[#allocation2 + $0x18] sm:$0xff] %v263
    %303 = vst [vmem:[#allocation2 + $0x20] sm:$0xff] %v192
    %304 = vst [vmem:[#allocation2 + $0x28] sm:$0xff] %v194
    %305 = vst [vmem:[#allocation2 + $0x30] sm:$0xff] %v265
    %306 = vst [vmem:[#allocation2 + $0x38] sm:$0xff] %v267
    %307 = vst [vmem:[#allocation2 + $0x40] sm:$0xff] %v198
    %308 = vst [vmem:[#allocation2 + $0x48] sm:$0xff] %v200
    %309 = vst [vmem:[#allocation2 + $0x50] sm:$0xff] %v271
    %310 = vst [vmem:[#allocation2 + $0x58] sm:$0xff] %v273
    %311 = vst [vmem:[#allocation2 + $0x60] sm:$0xff] %v202
    %312 = vst [vmem:[#allocation2 + $0x68] sm:$0xff] %v204
    %313 = vst [vmem:[#allocation2 + $0x70] sm:$0xff] %v275
    %314 = vst [vmem:[#allocation2 + $0x78] sm:$0xff] %v277
    %315 = vst [vmem:[#allocation2 + $0x80] sm:$0xff] %v208
    %316 = vst [vmem:[#allocation2 + $0x88] sm:$0xff] %v210
    %317 = vst [vmem:[#allocation2 + $0x90] sm:$0xff] %v281
    %318 = vst [vmem:[#allocation2 + $0x98] sm:$0xff] %v283
    %319 = vst [vmem:[#allocation2 + $0xa0] sm:$0xff] %v212
    %320 = vst [vmem:[#allocation2 + $0xa8] sm:$0xff] %v214
    %321 = vst [vmem:[#allocation2 + $0xb0] sm:$0xff] %v285
    %322 = vst [vmem:[#allocation2 + $0xb8] sm:$0xff] %v287
    %323 = vst [vmem:[#allocation2 + $0xc0] sm:$0xff] %v218
    %324 = vst [vmem:[#allocation2 + $0xc8] sm:$0xff] %v220
    %325 = vst [vmem:[#allocation2 + $0xd0] sm:$0xff] %v291
    %326 = vst [vmem:[#allocation2 + $0xd8] sm:$0xff] %v293
    %327 = vst [vmem:[#allocation2 + $0xe0] sm:$0xff] %v222
    %328 = vst [vmem:[#allocation2 + $0xe8] sm:$0xff] %v224
    %329 = vst [vmem:[#allocation2 + $0xf0] sm:$0xff] %v295
    %330 = vst [vmem:[#allocation2 + $0xf8] sm:$0xff] %v297
    // Predicated region
    $region14: #{tpu_custom_call.1} parent=1 // pred_check
      _
    $region15: #{tpu_custom_call.1} parent=1 // pred_check_branch
      %332 = sbr.rel (0) target = $region17
    $region16: #{tpu_custom_call.1} parent=1 // pred_region
      %s334 = ssub.s32 4096, 4096
      %335 = vsyncadd [#allocation3], %s334
      %s336 = sshll.u32 [#allocation2], 4
      %s337 = int_to_ptr.vmem [resolvable:$true] %s336
      %342 = dma.vmem_to_hbm [thread:$0]  %s337, 4096, %s3, [#allocation3], 512, 512, 32
    $region17: #{tpu_custom_call.1} parent=1 // pred_fallthru
      _
    // Predicated region
    $region18: #{tpu_custom_call.1} parent=1 // pred_check
      _
    $region19: #{tpu_custom_call.1} parent=1 // pred_check_branch
      %344 = sbr.rel (0) target = $region21
    $region20: #{tpu_custom_call.1} parent=1 // pred_region
      %345 = dma.done [#allocation3], 4096
    $region21: #{tpu_custom_call.1} parent=1 // pred_fallthru
      _
    %346 = vsyncpa [#allocation3], 1

</llo_original>
